<compile_context>
chip_gen: v7x
topology: tpu7x:2x2x1
jax: 0.10.0
libtpu: 0.0.40
codegen_flags: <defaults>
</compile_context>

<pallas_src>
import jax
import jax.numpy as jnp
from jax.experimental import pallas as pl
from jax.experimental.pallas import tpu as pltpu

IN_FEATURES = 9
OUT_FEATURES = 64
MAX_TILE_M = 4096                 # rows per grid step (multiple of 8)
SMALL_BATCH_XLA_THRESHOLD = 512   # below this, plain XLA fusion wins


def _repr_kernel(x_ref, w_ref, b_ref, o_ref):
    # x_ref: (tm, 9)  w_ref: (9, 64)  b_ref: (1, 64)  o_ref: (tm, 64)
    y = jnp.dot(
        x_ref[...], w_ref[...],
        preferred_element_type=jnp.float32,
        precision=jax.lax.Precision.HIGHEST,
    )
    y = y + b_ref[...]
    o_ref[...] = jnp.maximum(y, 0.0).astype(o_ref.dtype)


def prepare_params(weight, bias):
    """One-time conversion from torch nn.Linear layout to kernel layout.

    weight: (64, 9) torch convention -> (9, 64)
    bias:   (64,)                    -> (1, 64)
    """
    w_t = jnp.asarray(weight, jnp.float32).T
    b2d = jnp.asarray(bias, jnp.float32).reshape(1, OUT_FEATURES)
    return w_t, b2d


def representation_network_forward(x, w_t, b2d, *, out_dtype=jnp.float32,
                                   force_pallas=False):
    """Pallas forward pass of RepresentationNetwork.

    x:   any shape whose total size is a multiple of 9 (flattened to (-1, 9))
    w_t: (9, 64)  precomputed via prepare_params
    b2d: (1, 64)  precomputed via prepare_params
    returns (M, 64) in out_dtype
    """
    x2d = jnp.asarray(x, jnp.float32).reshape(-1, IN_FEATURES)
    m = x2d.shape[0]

    # Small-batch fast path: one XLA fusion beats a custom call + copies.
    if not force_pallas and m < SMALL_BATCH_XLA_THRESHOLD:
        y = jnp.maximum(x2d @ w_t + b2d, 0.0)
        return y.astype(out_dtype)

    # One row pad (only when needed) so the grid divides evenly.
    tm = min(MAX_TILE_M, ((m + 7) // 8) * 8)
    m_pad = ((m + tm - 1) // tm) * tm
    if m_pad != m:
        x2d = jnp.pad(x2d, ((0, m_pad - m), (0, 0)))

    out_bytes = jnp.dtype(out_dtype).itemsize
    cost = pl.CostEstimate(
        flops=2 * m * IN_FEATURES * OUT_FEATURES,
        transcendentals=0,
        bytes_accessed=(m * IN_FEATURES * 4
                        + m * OUT_FEATURES * out_bytes
                        + w_t.size * 4 + b2d.size * 4),
    )

    out = pl.pallas_call(
        _repr_kernel,
        out_shape=jax.ShapeDtypeStruct((m_pad, OUT_FEATURES), out_dtype),
        grid=(m_pad // tm,),
        in_specs=[
            pl.BlockSpec((tm, IN_FEATURES), lambda i: (i, 0)),
            pl.BlockSpec((IN_FEATURES, OUT_FEATURES), lambda i: (0, 0)),
            pl.BlockSpec((1, OUT_FEATURES), lambda i: (0, 0)),
        ],
        out_specs=pl.BlockSpec((tm, OUT_FEATURES), lambda i: (i, 0)),
        compiler_params=pltpu.CompilerParams(
            # "parallel" shards the row-tile axis across TensorCores on v7x.
            dimension_semantics=("parallel",),
            vmem_limit_bytes=32 * 1024 * 1024,
        ),
        cost_estimate=cost,
    )(x2d, w_t, b2d)

    # Padded rows hold relu(bias) != 0; slice them off (no-op when m_pad == m).
    if m_pad != m:
        out = out[:m]
    return out


def _init_params(key):
    # Deterministic init mimicking nn.Linear's uniform(-1/sqrt(fan_in), 1/sqrt(fan_in)).
    kw, kb = jax.random.split(key)
    bound = 1.0 / jnp.sqrt(jnp.float32(IN_FEATURES))
    weight = jax.random.uniform(
        kw, (OUT_FEATURES, IN_FEATURES), jnp.float32, -bound, bound
    )
    bias = jax.random.uniform(kb, (OUT_FEATURES,), jnp.float32, -bound, bound)
    return weight, bias


if __name__ == "__main__":
    key = jax.random.PRNGKey(0)
    kx, kp = jax.random.split(key)

    # Batch of 2 tic-tac-toe-like boards: (2, 3, 3) -> view(-1, 9) -> (2, 9)
    x = jax.random.normal(kx, (2, 3, 3), jnp.float32)
    weight, bias = _init_params(kp)
    w_t, b2d = prepare_params(weight, bias)

    ref = jnp.maximum(x.reshape(-1, 9) @ weight.T + bias, 0.0)

    # Small batch forced through the Pallas kernel (exercises the padding path).
    out = jax.block_until_ready(
        representation_network_forward(x, w_t, b2d, force_pallas=True)
    )
    assert out.shape == (2, OUT_FEATURES)
    assert jnp.allclose(out, ref, atol=1e-5, rtol=1e-5)

    # Small batch via the default XLA fast path.
    out_fast = jax.block_until_ready(representation_network_forward(x, w_t, b2d))
    assert jnp.allclose(out_fast, ref, atol=1e-5, rtol=1e-5)

    # Larger odd batch -> Pallas path with row padding and a multi-step grid.
    x_big = jax.random.normal(kp, (4099, 9), jnp.float32)
    out_big = jax.block_until_ready(
        representation_network_forward(x_big, w_t, b2d)
    )
    ref_big = jnp.maximum(x_big @ weight.T + bias, 0.0)
    assert out_big.shape == (4099, OUT_FEATURES)
    assert jnp.allclose(out_big, ref_big, atol=1e-5, rtol=1e-5)

    print("KERNEL_OK")
</pallas_src>

<mosaic_0001>
module attributes {stable_mosaic.version = 11 : i64} {
  func.func @_repr_kernel(%arg0: i32, %arg1: memref<8x9xf32, #tpu.memory_space<vmem>>, %arg2: memref<9x64xf32, #tpu.memory_space<vmem>>, %arg3: memref<1x64xf32, #tpu.memory_space<vmem>>, %arg4: memref<8x64xf32, #tpu.memory_space<vmem>>) attributes {dimension_semantics = [#tpu.dimension_semantics<parallel>], iteration_bounds = array<i64: 1>, scalar_prefetch = 0 : i64, scratch_operands = 0 : i64, tpu.core_type = #tpu.core_type<tc>, window_params = [{transform_indices = @transform_0, window_bounds = array<i64: 8, 9>}, {pipeline_mode = #tpu.pipeline_mode<synchronous>, transform_indices = @transform_1, window_bounds = array<i64: 9, 64>}, {pipeline_mode = #tpu.pipeline_mode<synchronous>, transform_indices = @transform_2, window_bounds = array<i64: 1, 64>}, {transform_indices = @transform_3, window_bounds = array<i64: 8, 64>}]} {
    %c0 = arith.constant 0 : index
    %c0_0 = arith.constant 0 : index
    %0 = vector.load %arg1[%c0, %c0_0] : memref<8x9xf32, #tpu.memory_space<vmem>>, vector<8x9xf32>
    %c0_1 = arith.constant 0 : index
    %c0_2 = arith.constant 0 : index
    %1 = vector.load %arg2[%c0_1, %c0_2] : memref<9x64xf32, #tpu.memory_space<vmem>>, vector<9x64xf32>
    %cst = arith.constant dense<0.000000e+00> : vector<8x64xf32>
    %2 = tpu.matmul %0, %1, %cst {dimension_numbers = #tpu.dot_dimension_numbers<[1], [0], [0], [1], [0, 0, 1, 1], [], []>, precision = #tpu.contract_precision<fp32>} : vector<8x9xf32>, vector<9x64xf32>, vector<8x64xf32> -> vector<8x64xf32>
    %c0_3 = arith.constant 0 : index
    %c0_4 = arith.constant 0 : index
    %3 = vector.load %arg3[%c0_3, %c0_4] : memref<1x64xf32, #tpu.memory_space<vmem>>, vector<1x64xf32>
    %4 = vector.broadcast %3 : vector<1x64xf32> to vector<8x64xf32>
    %5 = arith.addf %2, %4 : vector<8x64xf32>
    %cst_5 = arith.constant 0.000000e+00 : f32
    %6 = vector.broadcast %cst_5 : f32 to vector<8x64xf32>
    %7 = arith.maximumf %5, %6 : vector<8x64xf32>
    %c0_6 = arith.constant 0 : index
    %c0_7 = arith.constant 0 : index
    %8 = vector.load %arg4[%c0_6, %c0_7] : memref<8x64xf32, #tpu.memory_space<vmem>>, vector<8x64xf32>
    tpu.vector_store %arg4[%c0_6, %c0_7], %7 {strides = array<i32>} : memref<8x64xf32, #tpu.memory_space<vmem>>, vector<8x64xf32>,
    return
  }
  func.func @transform_0(%arg0: i32) -> (i32, i32) {
    %c0_i32 = arith.constant 0 : i32
    %c0_i32_0 = arith.constant 0 : i32
    return %arg0, %c0_i32 : i32, i32
  }
  func.func @transform_1(%arg0: i32) -> (i32, i32) {
    %c0_i32 = arith.constant 0 : i32
    %c0_i32_0 = arith.constant 0 : i32
    %c0_i32_1 = arith.constant 0 : i32
    return %c0_i32, %c0_i32_0 : i32, i32
  }
  func.func @transform_2(%arg0: i32) -> (i32, i32) {
    %c0_i32 = arith.constant 0 : i32
    %c0_i32_0 = arith.constant 0 : i32
    %c0_i32_1 = arith.constant 0 : i32
    return %c0_i32, %c0_i32_0 : i32, i32
  }
  func.func @transform_3(%arg0: i32) -> (i32, i32) {
    %c0_i32 = arith.constant 0 : i32
    %c0_i32_0 = arith.constant 0 : i32
    return %arg0, %c0_i32 : i32, i32
  }
}

</mosaic_0001>

<llo_original>
// kernel: tpu_custom_call.1
$region0: #{tpu_custom_call.1}
  #allocation0 [shape = 'u32[]', space=smem, size = 0x4, offset = 0x4, fixed_abs, tag = 'smem constant byte address 0x4 - core index']
  #allocation1 [shape = 'u32[144,128]{1,0:T(1,128)}', space=vmem, size = 0x12000, scoped, tag = 'internal scratch']
  %s0 = inlined_call_operand.hbm [shape: f32[8,9], index: 0, kind: input, shape index: {}]
  %s1 = inlined_call_operand.hbm [shape: f32[9,64], index: 1, kind: input, shape index: {}]
  %s2 = inlined_call_operand.vmem [shape: f32[1,64], index: 2, kind: input, shape index: {}]
  %s3 = inlined_call_operand.hbm [shape: f32[8,64], index: 3, kind: output, shape index: {}]
  %s4 = sld [smem:[#allocation0]]
  $region30: #{tpu_custom_call.1} parent=0
    _
  %s6 = ssub.s32 1, %s4
  %s7 = scalar_select 0, %s6, %s4
  $region1: #{tpu_custom_call.1} parent=0
    #allocation2 [shape = 'u8[4096]{0}', space=vmem, size = 0x1000, scoped, tag = 'input window, operand 0, single buffered']
    #allocation3 [shape = 's32[1]{0}', space=sflag, size = 0x4, scoped, tag = 'scoped memory for tpu_custom_call.1']
    #allocation4 [shape = 's32[1]{0}', space=sflag, size = 0x4, scoped, tag = 'scoped memory for tpu_custom_call.1']
    #allocation5 [shape = 'u8[8192]{0}', space=vmem, size = 0x2000, scoped, tag = 'input window, operand 1, single buffered']
    #allocation6 [shape = 's32[1]{0}', space=sflag, size = 0x4, scoped, tag = 'scoped memory for tpu_custom_call.1']
    #allocation7 [shape = 'u8[4096]{0}', space=vmem, size = 0x1000, scoped, tag = 'output window, operand 0, single buffered']
    %8 = vsyncpa [#allocation3], 0
    %9 = vsyncpa [#allocation6], 0
    %10 = vsyncpa [#allocation4], 0
    // Predicated region
    $region2: #{tpu_custom_call.1} parent=1 // pred_check
      _
    $region3: #{tpu_custom_call.1} parent=1 // pred_check_branch
      %12 = sbr.rel (0) target = $region5
    $region4: #{tpu_custom_call.1} parent=1 // pred_region
      %s14 = ssub.s32 128, 128
      %15 = vsyncadd [#allocation3], %s14
      %s17 = sshll.u32 [#allocation2], 4
      %s18 = int_to_ptr.vmem [resolvable:$true] %s17
      %20 = dma.hbm_to_vmem [thread:$0]  %s0, 128, %s18, [#allocation3]
    $region5: #{tpu_custom_call.1} parent=1 // pred_fallthru
      _
    // Predicated region
    $region6: #{tpu_custom_call.1} parent=1 // pred_check
      _
    $region7: #{tpu_custom_call.1} parent=1 // pred_check_branch
      %22 = sbr.rel (0) target = $region9
    $region8: #{tpu_custom_call.1} parent=1 // pred_region
      %s24 = ssub.s32 256, 256
      %25 = vsyncadd [#allocation6], %s24
      %s26 = sshll.u32 [#allocation5], 4
      %s27 = int_to_ptr.vmem [resolvable:$true] %s26
      %32 = dma.hbm_to_vmem [thread:$0]  %s1, 256, %s27, [#allocation6], 128, 128, 8
    $region9: #{tpu_custom_call.1} parent=1 // pred_fallthru
      _
    // Predicated region
    $region10: #{tpu_custom_call.1} parent=1 // pred_check
      _
    $region11: #{tpu_custom_call.1} parent=1 // pred_check_branch
      %34 = sbr.rel (0) target = $region13
    $region12: #{tpu_custom_call.1} parent=1 // pred_region
      _
    $region13: #{tpu_custom_call.1} parent=1 // pred_fallthru
      _
    // Predicated region
    $region14: #{tpu_custom_call.1} parent=1 // pred_check
      _
    $region15: #{tpu_custom_call.1} parent=1 // pred_check_branch
      %36 = sbr.rel (0) target = $region17
    $region16: #{tpu_custom_call.1} parent=1 // pred_region
      %37 = dma.done [#allocation3], 128
    $region17: #{tpu_custom_call.1} parent=1 // pred_fallthru
      _
    // Predicated region
    $region18: #{tpu_custom_call.1} parent=1 // pred_check
      _
    $region19: #{tpu_custom_call.1} parent=1 // pred_check_branch
      %39 = sbr.rel (0) target = $region21
    $region20: #{tpu_custom_call.1} parent=1 // pred_region
      %40 = dma.done [#allocation6], 256
    $region21: #{tpu_custom_call.1} parent=1 // pred_fallthru
      _
    %v41 = vld [vmem:[#allocation2] sm:$0xff]
    %v42 = vld [vmem:[#allocation5] sm:$0xff]
    %v43 = vld [vmem:[#allocation5 + $0x8] sm:$0x1]
    %v44 = vld [vmem:[%s2] sm:$0x1]
    %v46 = vlaneseq
    %v47 = vshrl.u32 %v46, 7
    %v48 = vsub.s32 0, %v47
    %v49 = vrot.slane %v44, %v48
    %vm51 = vcmask 72704
    %v53 = vsel %vm51, %v41, 0
    %vm55 = vcmask 1040384
    %v57 = vsel %vm55, %v43, 0
    %59 = vmatprep.subr.mxu0 0.0
    %v60 = vand.u32 %v42, 4294901760
    %61 = vmatpush1.msra.mxu0 %v60
    %62 = vmatprep.subr.mxu0 0.0
    %v63 = vand.u32 %v57, 4294901760
    %64 = vmatpush1.msra.mxu0 %v63
    %65 = vmatprep.subr.mxu0 0.0
    %66 = vmatpush1.msra.mxu0 0.0
    %67 = vmatprep.subr.mxu0 0.0
    %68 = vmatpush1.msra.mxu0 0.0
    %69 = vmatprep.subr.mxu0 0.0
    %70 = vmatpush1.msra.mxu0 0.0
    %71 = vmatprep.subr.mxu0 0.0
    %72 = vmatpush1.msra.mxu0 0.0
    %73 = vmatprep.subr.mxu0 0.0
    %74 = vmatpush1.msra.mxu0 0.0
    %75 = vmatprep.subr.mxu0 0.0
    %76 = vmatpush1.msra.mxu0 0.0
    %77 = vmatprep.subr.mxu0 0.0
    %78 = vmatpush1.msra.mxu0 0.0
    %79 = vmatprep.subr.mxu0 0.0
    %80 = vmatpush1.msra.mxu0 0.0
    %81 = vmatprep.subr.mxu0 0.0
    %82 = vmatpush1.msra.mxu0 0.0
    %83 = vmatprep.subr.mxu0 0.0
    %84 = vmatpush1.msra.mxu0 0.0
    %85 = vmatprep.subr.mxu0 0.0
    %86 = vmatpush1.msra.mxu0 0.0
    %87 = vmatprep.subr.mxu0 0.0
    %88 = vmatpush1.msra.mxu0 0.0
    %89 = vmatprep.subr.mxu0 0.0
    %90 = vmatpush1.msra.mxu0 0.0
    %91 = vmatprep.subr.mxu0 0.0
    %92 = vmatpush1.msra.mxu0 0.0
    %93 = vmatprep.subr.mxu0 0.0
    %94 = vmatpush1.msra.mxu0 0.0
    %95 = vmatprep.subr.mxu0 0.0
    %96 = vmatpush1.msra.mxu0 0.0
    %97 = vmatprep.subr.mxu0 0.0
    %98 = vmatpush1.msra.mxu0 0.0
    %99 = vmatprep.subr.mxu0 0.0
    %100 = vmatpush1.msra.mxu0 0.0
    %101 = vmatprep.subr.mxu0 0.0
    %102 = vmatpush1.msra.mxu0 0.0
    %103 = vmatprep.subr.mxu0 0.0
    %104 = vmatpush1.msra.mxu0 0.0
    %105 = vmatprep.subr.mxu0 0.0
    %106 = vmatpush1.msra.mxu0 0.0
    %107 = vmatprep.subr.mxu0 0.0
    %108 = vmatpush1.msra.mxu0 0.0
    %109 = vmatprep.subr.mxu0 0.0
    %110 = vmatpush1.msra.mxu0 0.0
    %111 = vmatprep.subr.mxu0 0.0
    %112 = vmatpush1.msra.mxu0 0.0
    %113 = vmatprep.subr.mxu0 0.0
    %114 = vmatpush1.msra.mxu0 0.0
    %115 = vmatprep.subr.mxu0 0.0
    %116 = vmatpush1.msra.mxu0 0.0
    %117 = vmatprep.subr.mxu0 0.0
    %118 = vmatpush1.msra.mxu0 0.0
    %119 = vmatprep.subr.mxu0 0.0
    %120 = vmatpush1.msra.mxu0 0.0
    %121 = vmatprep.subr.mxu0 0.0
    %122 = vmatpush1.msra.mxu0 0.0
    %123 = vmatprep.subr.mxu0 0.0
    %124 = vmatpush1.msra.mxu0 0.0
    %125 = vmatprep.mubr.f32.mxu0 0.0
    %v126 = vand.u32 %v53, 4294901760
    %v127 = vsub.f32 %v53, %v126
    %v128 = vand.u32 %v127, 4294901760
    %v129 = vsub.f32 %v127, %v128
    %v130 = vand.u32 %v129, 4294901760
    %131 = vmatmul.mubr.f32.gmra.mrb[0].mxu0 %v130
    %v132 = vpop.f32.mrb[0].mxu0
    %v133 = vadd.f32 %v49, %v132
    %v134 = vpop.f32.mrb[0].mxu0
    %135 = vdwg.mxu0
    %136 = vmatprep.subr.mxu0 0.0
    %v137 = vand.u32 %v42, 4294901760
    %v138 = vsub.f32 %v42, %v137
    %v139 = vand.u32 %v138, 4294901760
    %v140 = vsub.f32 %v138, %v139
    %v141 = vand.u32 %v140, 4294901760
    %142 = vmatpush1.msra.mxu0 %v141
    %143 = vmatprep.subr.mxu0 0.0
    %v144 = vand.u32 %v57, 4294901760
    %v145 = vsub.f32 %v57, %v144
    %v146 = vand.u32 %v145, 4294901760
    %v147 = vsub.f32 %v145, %v146
    %v148 = vand.u32 %v147, 4294901760
    %149 = vmatpush1.msra.mxu0 %v148
    %150 = vmatprep.subr.mxu0 0.0
    %151 = vmatpush1.msra.mxu0 0.0
    %152 = vmatprep.subr.mxu0 0.0
    %153 = vmatpush1.msra.mxu0 0.0
    %154 = vmatprep.subr.mxu0 0.0
    %155 = vmatpush1.msra.mxu0 0.0
    %156 = vmatprep.subr.mxu0 0.0
    %157 = vmatpush1.msra.mxu0 0.0
    %158 = vmatprep.subr.mxu0 0.0
    %159 = vmatpush1.msra.mxu0 0.0
    %160 = vmatprep.subr.mxu0 0.0
    %161 = vmatpush1.msra.mxu0 0.0
    %162 = vmatprep.subr.mxu0 0.0
    %163 = vmatpush1.msra.mxu0 0.0
    %164 = vmatprep.subr.mxu0 0.0
    %165 = vmatpush1.msra.mxu0 0.0
    %166 = vmatprep.subr.mxu0 0.0
    %167 = vmatpush1.msra.mxu0 0.0
    %168 = vmatprep.subr.mxu0 0.0
    %169 = vmatpush1.msra.mxu0 0.0
    %170 = vmatprep.subr.mxu0 0.0
    %171 = vmatpush1.msra.mxu0 0.0
    %172 = vmatprep.subr.mxu0 0.0
    %173 = vmatpush1.msra.mxu0 0.0
    %174 = vmatprep.subr.mxu0 0.0
    %175 = vmatpush1.msra.mxu0 0.0
    %176 = vmatprep.subr.mxu0 0.0
    %177 = vmatpush1.msra.mxu0 0.0
    %178 = vmatprep.subr.mxu0 0.0
    %179 = vmatpush1.msra.mxu0 0.0
    %180 = vmatprep.subr.mxu0 0.0
    %181 = vmatpush1.msra.mxu0 0.0
    %182 = vmatprep.subr.mxu0 0.0
    %183 = vmatpush1.msra.mxu0 0.0
    %184 = vmatprep.subr.mxu0 0.0
    %185 = vmatpush1.msra.mxu0 0.0
    %186 = vmatprep.subr.mxu0 0.0
    %187 = vmatpush1.msra.mxu0 0.0
    %188 = vmatprep.subr.mxu0 0.0
    %189 = vmatpush1.msra.mxu0 0.0
    %190 = vmatprep.subr.mxu0 0.0
    %191 = vmatpush1.msra.mxu0 0.0
    %192 = vmatprep.subr.mxu0 0.0
    %193 = vmatpush1.msra.mxu0 0.0
    %194 = vmatprep.subr.mxu0 0.0
    %195 = vmatpush1.msra.mxu0 0.0
    %196 = vmatprep.subr.mxu0 0.0
    %197 = vmatpush1.msra.mxu0 0.0
    %198 = vmatprep.subr.mxu0 0.0
    %199 = vmatpush1.msra.mxu0 0.0
    %200 = vmatprep.subr.mxu0 0.0
    %201 = vmatpush1.msra.mxu0 0.0
    %202 = vmatprep.subr.mxu0 0.0
    %203 = vmatpush1.msra.mxu0 0.0
    %204 = vmatprep.subr.mxu0 0.0
    %205 = vmatpush1.msra.mxu0 0.0
    %206 = vmatprep.subr.mxu0 0.0
    %207 = vmatpush1.msra.mxu0 0.0
    %208 = vmatprep.subr.mxu0 0.0
    %209 = vmatpush1.msra.mxu0 0.0
    %210 = vmatprep.mubr.f32.mxu0 0.0
    %v211 = vand.u32 %v53, 4294901760
    %212 = vmatmul.mubr.f32.gmra.mrb[0].mxu0 %v211
    %v213 = vpop.f32.mrb[0].mxu0
    %v214 = vadd.f32 %v133, %v213
    %v215 = vpop.f32.mrb[0].mxu0
    %216 = vdwg.mxu0
    %217 = vmatprep.subr.mxu0 0.0
    %v218 = vand.u32 %v42, 4294901760
    %v219 = vsub.f32 %v42, %v218
    %220 = vmatpush1.msra.mxu0 %v219
    %221 = vmatprep.subr.mxu0 0.0
    %v222 = vand.u32 %v57, 4294901760
    %v223 = vsub.f32 %v57, %v222
    %224 = vmatpush1.msra.mxu0 %v223
    %225 = vmatprep.subr.mxu0 0.0
    %226 = vmatpush1.msra.mxu0 0.0
    %227 = vmatprep.subr.mxu0 0.0
    %228 = vmatpush1.msra.mxu0 0.0
    %229 = vmatprep.subr.mxu0 0.0
    %230 = vmatpush1.msra.mxu0 0.0
    %231 = vmatprep.subr.mxu0 0.0
    %232 = vmatpush1.msra.mxu0 0.0
    %233 = vmatprep.subr.mxu0 0.0
    %234 = vmatpush1.msra.mxu0 0.0
    %235 = vmatprep.subr.mxu0 0.0
    %236 = vmatpush1.msra.mxu0 0.0
    %237 = vmatprep.subr.mxu0 0.0
    %238 = vmatpush1.msra.mxu0 0.0
    %239 = vmatprep.subr.mxu0 0.0
    %240 = vmatpush1.msra.mxu0 0.0
    %241 = vmatprep.subr.mxu0 0.0
    %242 = vmatpush1.msra.mxu0 0.0
    %243 = vmatprep.subr.mxu0 0.0
    %244 = vmatpush1.msra.mxu0 0.0
    %245 = vmatprep.subr.mxu0 0.0
    %246 = vmatpush1.msra.mxu0 0.0
    %247 = vmatprep.subr.mxu0 0.0
    %248 = vmatpush1.msra.mxu0 0.0
    %249 = vmatprep.subr.mxu0 0.0
    %250 = vmatpush1.msra.mxu0 0.0
    %251 = vmatprep.subr.mxu0 0.0
    %252 = vmatpush1.msra.mxu0 0.0
    %253 = vmatprep.subr.mxu0 0.0
    %254 = vmatpush1.msra.mxu0 0.0
    %255 = vmatprep.subr.mxu0 0.0
    %256 = vmatpush1.msra.mxu0 0.0
    %257 = vmatprep.subr.mxu0 0.0
    %258 = vmatpush1.msra.mxu0 0.0
    %259 = vmatprep.subr.mxu0 0.0
    %260 = vmatpush1.msra.mxu0 0.0
    %261 = vmatprep.subr.mxu0 0.0
    %262 = vmatpush1.msra.mxu0 0.0
    %263 = vmatprep.subr.mxu0 0.0
    %264 = vmatpush1.msra.mxu0 0.0
    %265 = vmatprep.subr.mxu0 0.0
    %266 = vmatpush1.msra.mxu0 0.0
    %267 = vmatprep.subr.mxu0 0.0
    %268 = vmatpush1.msra.mxu0 0.0
    %269 = vmatprep.subr.mxu0 0.0
    %270 = vmatpush1.msra.mxu0 0.0
    %271 = vmatprep.subr.mxu0 0.0
    %272 = vmatpush1.msra.mxu0 0.0
    %273 = vmatprep.subr.mxu0 0.0
    %274 = vmatpush1.msra.mxu0 0.0
    %275 = vmatprep.subr.mxu0 0.0
    %276 = vmatpush1.msra.mxu0 0.0
    %277 = vmatprep.subr.mxu0 0.0
    %278 = vmatpush1.msra.mxu0 0.0
    %279 = vmatprep.subr.mxu0 0.0
    %280 = vmatpush1.msra.mxu0 0.0
    %281 = vmatprep.subr.mxu0 0.0
    %282 = vmatpush1.msra.mxu0 0.0
    %283 = vmatprep.subr.mxu0 0.0
    %284 = vmatpush1.msra.mxu0 0.0
    %285 = vmatprep.mubr.f32.mxu0 0.0
    %v286 = vand.u32 %v53, 4294901760
    %v287 = vsub.f32 %v53, %v286
    %288 = vmatmul.mubr.f32.gmra.mrb[0].mxu0 %v287
    %v289 = vpop.f32.mrb[0].mxu0
    %v290 = vadd.f32 %v214, %v289
    %v291 = vpop.f32.mrb[0].mxu0
    %292 = vdwg.mxu0
    %293 = vmatprep.subr.mxu0 0.0
    %v294 = vand.u32 %v42, 4294901760
    %295 = vmatpush1.msra.mxu0 %v294
    %296 = vmatprep.subr.mxu0 0.0
    %v297 = vand.u32 %v57, 4294901760
    %298 = vmatpush1.msra.mxu0 %v297
    %299 = vmatprep.subr.mxu0 0.0
    %300 = vmatpush1.msra.mxu0 0.0
    %301 = vmatprep.subr.mxu0 0.0
    %302 = vmatpush1.msra.mxu0 0.0
    %303 = vmatprep.subr.mxu0 0.0
    %304 = vmatpush1.msra.mxu0 0.0
    %305 = vmatprep.subr.mxu0 0.0
    %306 = vmatpush1.msra.mxu0 0.0
    %307 = vmatprep.subr.mxu0 0.0
    %308 = vmatpush1.msra.mxu0 0.0
    %309 = vmatprep.subr.mxu0 0.0
    %310 = vmatpush1.msra.mxu0 0.0
    %311 = vmatprep.subr.mxu0 0.0
    %312 = vmatpush1.msra.mxu0 0.0
    %313 = vmatprep.subr.mxu0 0.0
    %314 = vmatpush1.msra.mxu0 0.0
    %315 = vmatprep.subr.mxu0 0.0
    %316 = vmatpush1.msra.mxu0 0.0
    %317 = vmatprep.subr.mxu0 0.0
    %318 = vmatpush1.msra.mxu0 0.0
    %319 = vmatprep.subr.mxu0 0.0
    %320 = vmatpush1.msra.mxu0 0.0
    %321 = vmatprep.subr.mxu0 0.0
    %322 = vmatpush1.msra.mxu0 0.0
    %323 = vmatprep.subr.mxu0 0.0
    %324 = vmatpush1.msra.mxu0 0.0
    %325 = vmatprep.subr.mxu0 0.0
    %326 = vmatpush1.msra.mxu0 0.0
    %327 = vmatprep.subr.mxu0 0.0
    %328 = vmatpush1.msra.mxu0 0.0
    %329 = vmatprep.subr.mxu0 0.0
    %330 = vmatpush1.msra.mxu0 0.0
    %331 = vmatprep.subr.mxu0 0.0
    %332 = vmatpush1.msra.mxu0 0.0
    %333 = vmatprep.subr.mxu0 0.0
    %334 = vmatpush1.msra.mxu0 0.0
    %335 = vmatprep.subr.mxu0 0.0
    %336 = vmatpush1.msra.mxu0 0.0
    %337 = vmatprep.subr.mxu0 0.0
    %338 = vmatpush1.msra.mxu0 0.0
    %339 = vmatprep.subr.mxu0 0.0
    %340 = vmatpush1.msra.mxu0 0.0
    %341 = vmatprep.subr.mxu0 0.0
    %342 = vmatpush1.msra.mxu0 0.0
    %343 = vmatprep.subr.mxu0 0.0
    %344 = vmatpush1.msra.mxu0 0.0
    %345 = vmatprep.subr.mxu0 0.0
    %346 = vmatpush1.msra.mxu0 0.0
    %347 = vmatprep.subr.mxu0 0.0
    %348 = vmatpush1.msra.mxu0 0.0
    %349 = vmatprep.subr.mxu0 0.0
    %350 = vmatpush1.msra.mxu0 0.0
    %351 = vmatprep.subr.mxu0 0.0
    %352 = vmatpush1.msra.mxu0 0.0
    %353 = vmatprep.subr.mxu0 0.0
    %354 = vmatpush1.msra.mxu0 0.0
    %355 = vmatprep.subr.mxu0 0.0
    %356 = vmatpush1.msra.mxu0 0.0
    %357 = vmatprep.subr.mxu0 0.0
    %358 = vmatpush1.msra.mxu0 0.0
    %359 = vmatprep.mubr.f32.mxu0 0.0
    %v360 = vand.u32 %v53, 4294901760
    %v361 = vsub.f32 %v53, %v360
    %v362 = vand.u32 %v361, 4294901760
    %363 = vmatmul.mubr.f32.gmra.mrb[0].mxu0 %v362
    %v364 = vpop.f32.mrb[0].mxu0
    %v365 = vadd.f32 %v290, %v364
    %v366 = vpop.f32.mrb[0].mxu0
    %367 = vdwg.mxu0
    %368 = vmatprep.subr.mxu0 0.0
    %v369 = vand.u32 %v42, 4294901760
    %v370 = vsub.f32 %v42, %v369
    %v371 = vand.u32 %v370, 4294901760
    %372 = vmatpush1.msra.mxu0 %v371
    %373 = vmatprep.subr.mxu0 0.0
    %v374 = vand.u32 %v57, 4294901760
    %v375 = vsub.f32 %v57, %v374
    %v376 = vand.u32 %v375, 4294901760
    %377 = vmatpush1.msra.mxu0 %v376
    %378 = vmatprep.subr.mxu0 0.0
    %379 = vmatpush1.msra.mxu0 0.0
    %380 = vmatprep.subr.mxu0 0.0
    %381 = vmatpush1.msra.mxu0 0.0
    %382 = vmatprep.subr.mxu0 0.0
    %383 = vmatpush1.msra.mxu0 0.0
    %384 = vmatprep.subr.mxu0 0.0
    %385 = vmatpush1.msra.mxu0 0.0
    %386 = vmatprep.subr.mxu0 0.0
    %387 = vmatpush1.msra.mxu0 0.0
    %388 = vmatprep.subr.mxu0 0.0
    %389 = vmatpush1.msra.mxu0 0.0
    %390 = vmatprep.subr.mxu0 0.0
    %391 = vmatpush1.msra.mxu0 0.0
    %392 = vmatprep.subr.mxu0 0.0
    %393 = vmatpush1.msra.mxu0 0.0
    %394 = vmatprep.subr.mxu0 0.0
    %395 = vmatpush1.msra.mxu0 0.0
    %396 = vmatprep.subr.mxu0 0.0
    %397 = vmatpush1.msra.mxu0 0.0
    %398 = vmatprep.subr.mxu0 0.0
    %399 = vmatpush1.msra.mxu0 0.0
    %400 = vmatprep.subr.mxu0 0.0
    %401 = vmatpush1.msra.mxu0 0.0
    %402 = vmatprep.subr.mxu0 0.0
    %403 = vmatpush1.msra.mxu0 0.0
    %404 = vmatprep.subr.mxu0 0.0
    %405 = vmatpush1.msra.mxu0 0.0
    %406 = vmatprep.subr.mxu0 0.0
    %407 = vmatpush1.msra.mxu0 0.0
    %408 = vmatprep.subr.mxu0 0.0
    %409 = vmatpush1.msra.mxu0 0.0
    %410 = vmatprep.subr.mxu0 0.0
    %411 = vmatpush1.msra.mxu0 0.0
    %412 = vmatprep.subr.mxu0 0.0
    %413 = vmatpush1.msra.mxu0 0.0
    %414 = vmatprep.subr.mxu0 0.0
    %415 = vmatpush1.msra.mxu0 0.0
    %416 = vmatprep.subr.mxu0 0.0
    %417 = vmatpush1.msra.mxu0 0.0
    %418 = vmatprep.subr.mxu0 0.0
    %419 = vmatpush1.msra.mxu0 0.0
    %420 = vmatprep.subr.mxu0 0.0
    %421 = vmatpush1.msra.mxu0 0.0
    %422 = vmatprep.subr.mxu0 0.0
    %423 = vmatpush1.msra.mxu0 0.0
    %424 = vmatprep.subr.mxu0 0.0
    %425 = vmatpush1.msra.mxu0 0.0
    %426 = vmatprep.subr.mxu0 0.0
    %427 = vmatpush1.msra.mxu0 0.0
    %428 = vmatprep.subr.mxu0 0.0
    %429 = vmatpush1.msra.mxu0 0.0
    %430 = vmatprep.subr.mxu0 0.0
    %431 = vmatpush1.msra.mxu0 0.0
    %432 = vmatprep.subr.mxu0 0.0
    %433 = vmatpush1.msra.mxu0 0.0
    %434 = vmatprep.subr.mxu0 0.0
    %435 = vmatpush1.msra.mxu0 0.0
    %436 = vmatprep.subr.mxu0 0.0
    %437 = vmatpush1.msra.mxu0 0.0
    %438 = vmatprep.mubr.f32.mxu0 0.0
    %v439 = vand.u32 %v53, 4294901760
    %440 = vmatmul.mubr.f32.gmra.mrb[0].mxu0 %v439
    %v441 = vpop.f32.mrb[0].mxu0
    %v442 = vadd.f32 %v365, %v441
    %v443 = vpop.f32.mrb[0].mxu0
    %444 = vdwg.mxu0
    %445 = vmatprep.subr.mxu0 0.0
    %v446 = vand.u32 %v42, 4294901760
    %447 = vmatpush1.msra.mxu0 %v446
    %448 = vmatprep.subr.mxu0 0.0
    %v449 = vand.u32 %v57, 4294901760
    %450 = vmatpush1.msra.mxu0 %v449
    %451 = vmatprep.subr.mxu0 0.0
    %452 = vmatpush1.msra.mxu0 0.0
    %453 = vmatprep.subr.mxu0 0.0
    %454 = vmatpush1.msra.mxu0 0.0
    %455 = vmatprep.subr.mxu0 0.0
    %456 = vmatpush1.msra.mxu0 0.0
    %457 = vmatprep.subr.mxu0 0.0
    %458 = vmatpush1.msra.mxu0 0.0
    %459 = vmatprep.subr.mxu0 0.0
    %460 = vmatpush1.msra.mxu0 0.0
    %461 = vmatprep.subr.mxu0 0.0
    %462 = vmatpush1.msra.mxu0 0.0
    %463 = vmatprep.subr.mxu0 0.0
    %464 = vmatpush1.msra.mxu0 0.0
    %465 = vmatprep.subr.mxu0 0.0
    %466 = vmatpush1.msra.mxu0 0.0
    %467 = vmatprep.subr.mxu0 0.0
    %468 = vmatpush1.msra.mxu0 0.0
    %469 = vmatprep.subr.mxu0 0.0
    %470 = vmatpush1.msra.mxu0 0.0
    %471 = vmatprep.subr.mxu0 0.0
    %472 = vmatpush1.msra.mxu0 0.0
    %473 = vmatprep.subr.mxu0 0.0
    %474 = vmatpush1.msra.mxu0 0.0
    %475 = vmatprep.subr.mxu0 0.0
    %476 = vmatpush1.msra.mxu0 0.0
    %477 = vmatprep.subr.mxu0 0.0
    %478 = vmatpush1.msra.mxu0 0.0
    %479 = vmatprep.subr.mxu0 0.0
    %480 = vmatpush1.msra.mxu0 0.0
    %481 = vmatprep.subr.mxu0 0.0
    %482 = vmatpush1.msra.mxu0 0.0
    %483 = vmatprep.subr.mxu0 0.0
    %484 = vmatpush1.msra.mxu0 0.0
    %485 = vmatprep.subr.mxu0 0.0
    %486 = vmatpush1.msra.mxu0 0.0
    %487 = vmatprep.subr.mxu0 0.0
    %488 = vmatpush1.msra.mxu0 0.0
    %489 = vmatprep.subr.mxu0 0.0
    %490 = vmatpush1.msra.mxu0 0.0
    %491 = vmatprep.subr.mxu0 0.0
    %492 = vmatpush1.msra.mxu0 0.0
    %493 = vmatprep.subr.mxu0 0.0
    %494 = vmatpush1.msra.mxu0 0.0
    %495 = vmatprep.subr.mxu0 0.0
    %496 = vmatpush1.msra.mxu0 0.0
    %497 = vmatprep.subr.mxu0 0.0
    %498 = vmatpush1.msra.mxu0 0.0
    %499 = vmatprep.subr.mxu0 0.0
    %500 = vmatpush1.msra.mxu0 0.0
    %501 = vmatprep.subr.mxu0 0.0
    %502 = vmatpush1.msra.mxu0 0.0
    %503 = vmatprep.subr.mxu0 0.0
    %504 = vmatpush1.msra.mxu0 0.0
    %505 = vmatprep.subr.mxu0 0.0
    %506 = vmatpush1.msra.mxu0 0.0
    %507 = vmatprep.subr.mxu0 0.0
    %508 = vmatpush1.msra.mxu0 0.0
    %509 = vmatprep.subr.mxu0 0.0
    %510 = vmatpush1.msra.mxu0 0.0
    %511 = vmatprep.mubr.f32.mxu0 0.0
    %v512 = vand.u32 %v53, 4294901760
    %513 = vmatmul.mubr.f32.gmra.mrb[0].mxu0 %v512
    %v514 = vpop.f32.mrb[0].mxu0
    %v515 = vadd.f32 %v442, %v514
    %v516 = vpop.f32.mrb[0].mxu0
    %517 = vdwg.mxu0
    %v518 = vmax.f32 %v515, 0.0
    %vm519 = vcmask 523264
    %520 = vst.msk [vmem:[#allocation7] sm:$0xff] %vm519, %v518
    // Predicated region
    $region22: #{tpu_custom_call.1} parent=1 // pred_check
      _
    $region23: #{tpu_custom_call.1} parent=1 // pred_check_branch
      %522 = sbr.rel (0) target = $region25
    $region24: #{tpu_custom_call.1} parent=1 // pred_region
      %s524 = ssub.s32 128, 128
      %525 = vsyncadd [#allocation4], %s524
      %s527 = sshll.u32 [#allocation7], 4
      %s528 = int_to_ptr.vmem [resolvable:$true] %s527
      %530 = dma.vmem_to_hbm [thread:$0]  %s528, 128, %s3, [#allocation4]
    $region25: #{tpu_custom_call.1} parent=1 // pred_fallthru
      _
    // Predicated region
    $region26: #{tpu_custom_call.1} parent=1 // pred_check
      _
    $region27: #{tpu_custom_call.1} parent=1 // pred_check_branch
      %532 = sbr.rel (0) target = $region29
    $region28: #{tpu_custom_call.1} parent=1 // pred_region
      %533 = dma.done [#allocation4], 128
    $region29: #{tpu_custom_call.1} parent=1 // pred_fallthru
      _
    %534 = vsyncpa [#allocation3], 1
    %535 = vsyncpa [#allocation6], 1
    %536 = vsyncpa [#allocation4], 1

</llo_original>
